<compile_context>
chip_gen: v5e
topology: v5e:2x2
jax: 0.10.0
libtpu: 0.0.40
codegen_flags: <defaults>
</compile_context>

<pallas_src>
import jax
import jax.numpy as jnp
from jax import lax
from jax.experimental import pallas as pl
from jax.experimental.pallas import tpu as pltpu

_LANES = 128
_SUBLANES = 8
_TARGET_BLOCK_BYTES = 4 << 20           # per-input-block VMEM target (~4 MiB)
_DIRECT_PATH_MAX_ROW_BYTES = 256 << 10  # keep (b, n)-layout blocks bounded


def _make_kernel(*, tile_r, C, R, bpc, needs_mask):
    """Build the streaming-reduction kernel (all sizes are static closures)."""

    def kernel(x_ref, t_ref, out_ref):
        c = pl.program_id(0)   # core / parallel axis
        i = pl.program_id(1)   # streaming (reduction) axis

        @pl.when(i == 0)
        def _init():
            out_ref[...] = jnp.zeros_like(out_ref)

        x = x_ref[...].astype(jnp.float32)   # (tile_r, C)
        t = t_ref[...].astype(jnp.float32)

        # logsigmoid(x)*t + (logsigmoid(x) - x)*(1 - t)
        #   == x*t - max(x, 0) - log1p(exp(-|x|))        (numerically stable)
        elem = x * t - jnp.maximum(x, 0.0) - jnp.log1p(jnp.exp(-jnp.abs(x)))

        if needs_mask:
            # Rows past the end of the data (partial last block, or the
            # grid-padding block of the second core) hold garbage -> zero them.
            gb = c * bpc + i                                  # global block idx
            row = gb * tile_r + lax.broadcasted_iota(jnp.int32, (tile_r, C), 0)
            elem = jnp.where(row < R, elem, 0.0)

        if tile_r % _SUBLANES == 0:
            # Fold onto the vreg-shaped (8, C) accumulator: tile_r/8 stacked
            # vreg adds on the VPU, no per-step cross-lane/sublane reduce.
            out_ref[0] = out_ref[0] + elem.reshape(-1, _SUBLANES, C).sum(axis=0)
        else:
            # Tiny single-block case (fewer than 8 rows): plain row reduce
            # into sublane 0 of the accumulator.
            out_ref[0, 0:1, :] = out_ref[0, 0:1, :] + jnp.sum(
                elem, axis=0, keepdims=True)

    return kernel


def kl_loss(output, target, *, block_rows=None):
    """Pallas implementation of KLLoss.forward(output, target) -> scalar."""
    assert output.shape == target.shape and output.ndim == 2
    b, n = output.shape
    n_elems = b * n
    itemsize = jnp.dtype(output.dtype).itemsize

    # --- choose a (copy-free, if possible) 2-D (R, C) view ------------------
    if n_elems % _LANES == 0 and n_elems >= _SUBLANES * _LANES:
        # Lane-dense flatten: free reshape, every lane carries real data.
        C = _LANES
        R = n_elems // _LANES
        x2 = output.reshape(R, C)
        t2 = target.reshape(R, C)
    elif n * itemsize <= _DIRECT_PATH_MAX_ROW_BYTES:
        # Natural (b, n) layout: zero HBM copies; lanes beyond n are simply
        # not part of the block, only tail *rows* of the last block are masked.
        C = n
        R = b
        x2, t2 = output, target
    else:
        # Rare fallback: huge, misaligned class dim.  Pad the flat view to the
        # next lane multiple; (x=-30000, t=0) contributes exactly 0 in f32.
        pad = (-n_elems) % _LANES
        x2 = jnp.pad(output.reshape(-1), (0, pad), constant_values=-30000.0)
        t2 = jnp.pad(target.reshape(-1), (0, pad), constant_values=0.0)
        C = _LANES
        R = (n_elems + pad) // _LANES
        x2 = x2.reshape(R, C)
        t2 = t2.reshape(R, C)

    # --- tile / grid selection ----------------------------------------------
    c_vmem = pl.cdiv(C, _LANES) * _LANES          # lanes each block occupies
    budget_rows = (_TARGET_BLOCK_BYTES // (c_vmem * itemsize)) // _SUBLANES * _SUBLANES
    budget_rows = max(_SUBLANES, budget_rows)
    if block_rows is not None:                    # test / tuning override
        budget_rows = max(_SUBLANES, (block_rows // _SUBLANES) * _SUBLANES)
    # Either the full row extent (single block) or a multiple of 8 rows.
    tile_r = R if R <= budget_rows else budget_rows

    n_blocks = pl.cdiv(R, tile_r)
    num_cores = 2 if n_blocks >= 2 else 1         # v7x megacore split
    bpc = pl.cdiv(n_blocks, num_cores)            # blocks per core
    needs_mask = (R % tile_r != 0) or (num_cores * bpc != n_blocks)

    if num_cores * bpc == n_blocks:
        in_map = lambda c, i: (c * bpc + i, 0)
    else:
        # Clamp the grid-padding block of the last core onto the final real
        # block: its index repeats, so the pipeline skips the re-DMA, and the
        # row mask zeroes its contribution.
        in_map = lambda c, i: (jnp.minimum(c * bpc + i, n_blocks - 1), 0)

    block_in_bytes = tile_r * c_vmem * itemsize
    block_out_bytes = _SUBLANES * c_vmem * 4
    vmem_limit = 2 * 2 * block_in_bytes + 2 * block_out_bytes + (4 << 20)

    kernel = _make_kernel(tile_r=tile_r, C=C, R=R, bpc=bpc, needs_mask=needs_mask)

    partials = pl.pallas_call(
        kernel,
        out_shape=jax.ShapeDtypeStruct((num_cores, _SUBLANES, C), jnp.float32),
        grid_spec=pltpu.PrefetchScalarGridSpec(
            num_scalar_prefetch=0,
            grid=(num_cores, bpc),
            in_specs=[
                pl.BlockSpec((tile_r, C), in_map),
                pl.BlockSpec((tile_r, C), in_map),
            ],
            out_specs=pl.BlockSpec((1, _SUBLANES, C), lambda c, i: (c, 0, 0)),
        ),
        compiler_params=pltpu.CompilerParams(
            dimension_semantics=("parallel", "arbitrary"),
            vmem_limit_bytes=vmem_limit),
        cost_estimate=pl.CostEstimate(
            flops=6 * n_elems,
            transcendentals=2 * n_elems,
            bytes_accessed=2 * n_elems * itemsize + num_cores * _SUBLANES * C * 4),
    )(x2, t2)

    # loss = mean_b(-sum_j elem) = -(total sum) / b
    return -jnp.sum(partials) / b


def kl_loss_ref(output, target):
    """Pure-JAX reference mirroring the PyTorch module."""
    x = output.astype(jnp.float32)
    t = target.astype(jnp.float32)
    ls = jax.nn.log_sigmoid(x)
    val = -jnp.sum(ls * t + (ls - x) * (1.0 - t), axis=1)
    return jnp.mean(val)


if __name__ == "__main__":
    key = jax.random.PRNGKey(0)
    k1, k2, k3, k4, k5, k6 = jax.random.split(key, 6)

    # Small shape consistent with the module: (batch, classes) soft-label loss.
    B, N = 8, 32
    output = jax.random.normal(k1, (B, N), dtype=jnp.float32)
    target = jax.random.uniform(k2, (B, N), dtype=jnp.float32)
    loss = kl_loss(output, target)
    jax.block_until_ready(loss)
    ref = kl_loss_ref(output, target)
    assert jnp.allclose(loss, ref, rtol=1e-5, atol=1e-5), (loss, ref)

    # Misaligned class count (b*n not a multiple of 128): natural (b, n) path,
    # no padding copy, single block, no mask.
    B2, N2 = 16, 250
    output2 = jax.random.normal(k3, (B2, N2), dtype=jnp.float32)
    target2 = jax.random.uniform(k4, (B2, N2), dtype=jnp.float32)
    loss2 = kl_loss(output2, target2)
    jax.block_until_ready(loss2)
    ref2 = kl_loss_ref(output2, target2)
    assert jnp.allclose(loss2, ref2, rtol=1e-4, atol=1e-4), (loss2, ref2)

    # Lane-dense path with a forced small block (bf16 inputs): exercises the
    # 2-core "parallel" split, partial-last-block masking and the clamped
    # grid-padding block.
    B3, N3 = 64, 384
    output3 = jax.random.normal(k5, (B3, N3), dtype=jnp.bfloat16)
    target3 = jax.random.uniform(k6, (B3, N3), dtype=jnp.bfloat16)
    loss3 = kl_loss(output3, target3, block_rows=40)
    jax.block_until_ready(loss3)
    ref3 = kl_loss_ref(output3, target3)
    assert jnp.allclose(loss3, ref3, rtol=1e-3, atol=1e-3), (loss3, ref3)

    print("KERNEL_OK")
</pallas_src>

<mosaic_0001>
module attributes {stable_mosaic.version = 11 : i64} {
  func.func @kernel(%arg0: i32, %arg1: i32, %arg2: memref<8x32xf32, #tpu.memory_space<vmem>>, %arg3: memref<8x32xf32, #tpu.memory_space<vmem>>, %arg4: memref<1x8x32xf32, #tpu.memory_space<vmem>>) attributes {dimension_semantics = [#tpu.dimension_semantics<parallel>, #tpu.dimension_semantics<arbitrary>], iteration_bounds = array<i64: 1, 1>, scalar_prefetch = 0 : i64, scratch_operands = 0 : i64, tpu.core_type = #tpu.core_type<tc>, window_params = [{transform_indices = @transform_0, window_bounds = array<i64: 8, 32>}, {transform_indices = @transform_1, window_bounds = array<i64: 8, 32>}, {transform_indices = @transform_2, window_bounds = array<i64: 1, 8, 32>}]} {
    %c0_i32 = arith.constant 0 : i32
    %0 = arith.cmpi eq, %arg1, %c0_i32 : i32
    %1 = arith.extui %0 : i1 to i32
    %c0_i32_0 = arith.constant 0 : i32
    %2 = arith.cmpi ne, %1, %c0_i32_0 : i32
    scf.if %2 {
      %cst_12 = arith.constant 0.000000e+00 : f32
      %23 = vector.broadcast %cst_12 : f32 to vector<1x8x32xf32>
      %c0_13 = arith.constant 0 : index
      %c0_14 = arith.constant 0 : index
      %c0_15 = arith.constant 0 : index
      %24 = vector.load %arg4[%c0_13, %c0_14, %c0_15] : memref<1x8x32xf32, #tpu.memory_space<vmem>>, vector<1x8x32xf32>
      tpu.vector_store %arg4[%c0_13, %c0_14, %c0_15], %23 {strides = array<i32>} : memref<1x8x32xf32, #tpu.memory_space<vmem>>, vector<1x8x32xf32>,
    } else {
    }
    %c0 = arith.constant 0 : index
    %c0_1 = arith.constant 0 : index
    %3 = vector.load %arg2[%c0, %c0_1] : memref<8x32xf32, #tpu.memory_space<vmem>>, vector<8x32xf32>
    %c0_2 = arith.constant 0 : index
    %c0_3 = arith.constant 0 : index
    %4 = vector.load %arg3[%c0_2, %c0_3] : memref<8x32xf32, #tpu.memory_space<vmem>>, vector<8x32xf32>
    %5 = arith.mulf %3, %4 : vector<8x32xf32>
    %cst = arith.constant 0.000000e+00 : f32
    %6 = vector.broadcast %cst : f32 to vector<8x32xf32>
    %7 = arith.maximumf %3, %6 : vector<8x32xf32>
    %8 = arith.subf %5, %7 : vector<8x32xf32>
    %9 = math.absf %3 : vector<8x32xf32>
    %cst_4 = arith.constant 0.000000e+00 : f32
    %10 = vector.broadcast %cst_4 : f32 to vector<8x32xf32>
    %11 = arith.subf %10, %9 : vector<8x32xf32>
    %12 = math.exp %11 : vector<8x32xf32>
    %13 = math.log1p %12 : vector<8x32xf32>
    %14 = arith.subf %8, %13 : vector<8x32xf32>
    %c0_5 = arith.constant 0 : index
    %c0_6 = arith.constant 0 : index
    %c0_7 = arith.constant 0 : index
    %15 = vector.load %arg4[%c0_5, %c0_6, %c0_7] : memref<1x8x32xf32, #tpu.memory_space<vmem>>, vector<1x8x32xf32>
    %16 = vector.shape_cast %15 : vector<1x8x32xf32> to vector<8x32xf32>
    %17 = vector.shape_cast %14 : vector<8x32xf32> to vector<1x8x32xf32>
    %cst_8 = arith.constant dense<0.000000e+00> : vector<8x32xf32>
    %18 = vector.multi_reduction <add>, %17, %cst_8 [0] : vector<1x8x32xf32> to vector<8x32xf32>
    %19 = arith.addf %16, %18 : vector<8x32xf32>
    %c0_9 = arith.constant 0 : index
    %c0_10 = arith.constant 0 : index
    %c0_11 = arith.constant 0 : index
    %20 = vector.load %arg4[%c0_9, %c0_10, %c0_11] : memref<1x8x32xf32, #tpu.memory_space<vmem>>, vector<1x8x32xf32>
    %21 = vector.shape_cast %20 : vector<1x8x32xf32> to vector<8x32xf32>
    %22 = vector.shape_cast %19 : vector<8x32xf32> to vector<1x8x32xf32>
    tpu.vector_store %arg4[%c0_9, %c0_10, %c0_11], %22 {strides = array<i32>} : memref<1x8x32xf32, #tpu.memory_space<vmem>>, vector<1x8x32xf32>,
    return
  }
  func.func @transform_0(%arg0: i32, %arg1: i32) -> (i32, i32) {
    %c1_i32 = arith.constant 1 : i32
    %0 = arith.muli %arg0, %c1_i32 : i32
    %1 = arith.addi %0, %arg1 : i32
    %c0_i32 = arith.constant 0 : i32
    %c0_i32_0 = arith.constant 0 : i32
    return %1, %c0_i32 : i32, i32
  }
  func.func @transform_1(%arg0: i32, %arg1: i32) -> (i32, i32) {
    %c1_i32 = arith.constant 1 : i32
    %0 = arith.muli %arg0, %c1_i32 : i32
    %1 = arith.addi %0, %arg1 : i32
    %c0_i32 = arith.constant 0 : i32
    %c0_i32_0 = arith.constant 0 : i32
    return %1, %c0_i32 : i32, i32
  }
  func.func @transform_2(%arg0: i32, %arg1: i32) -> (i32, i32, i32) {
    %c0_i32 = arith.constant 0 : i32
    %c0_i32_0 = arith.constant 0 : i32
    %c0_i32_1 = arith.constant 0 : i32
    return %arg0, %c0_i32, %c0_i32_0 : i32, i32, i32
  }
}

</mosaic_0001>

<llo_original>
// kernel: tpu_custom_call.1
$region0: #{tpu_custom_call.1}
  #allocation0 [shape = 'u32[]', space=smem, size = 0x4, offset = 0x4, fixed_abs, tag = 'smem constant byte address 0x4 - core index']
  #allocation1 [shape = 'u32[72,128]{1,0:T(1,128)}', space=vmem, size = 0x9000, scoped, tag = 'internal scratch']
  %s0 = inlined_call_operand.hbm [shape: f32[8,32], index: 0, kind: input, shape index: {}]
  %s1 = inlined_call_operand.hbm [shape: f32[8,32], index: 1, kind: input, shape index: {}]
  %s2 = inlined_call_operand.hbm [shape: f32[1,8,32], index: 2, kind: output, shape index: {}]
  %s3 = sld [smem:[#allocation0]]
  $region30: #{tpu_custom_call.1} parent=0
    _
  %s5 = ssub.s32 1, %s3
  %s6 = scalar_select 0, %s5, %s3
  $region1: #{tpu_custom_call.1} parent=0
    #allocation2 [shape = 'u8[4096]{0}', space=vmem, size = 0x1000, scoped, tag = 'input window, operand 0, single buffered']
    #allocation3 [shape = 's32[1]{0}', space=sflag, size = 0x4, scoped, tag = 'scoped memory for tpu_custom_call.1']
    #allocation4 [shape = 's32[1]{0}', space=sflag, size = 0x4, scoped, tag = 'scoped memory for tpu_custom_call.1']
    #allocation5 [shape = 'u8[4096]{0}', space=vmem, size = 0x1000, scoped, tag = 'input window, operand 1, single buffered']
    #allocation6 [shape = 's32[1]{0}', space=sflag, size = 0x4, scoped, tag = 'scoped memory for tpu_custom_call.1']
    #allocation7 [shape = 'u8[4096]{0}', space=vmem, size = 0x1000, scoped, tag = 'output window, operand 0, single buffered']
    %7 = vsyncpa [#allocation3], 0
    %8 = vsyncpa [#allocation6], 0
    %9 = vsyncpa [#allocation4], 0
    // Predicated region
    $region2: #{tpu_custom_call.1} parent=1 // pred_check
      _
    $region3: #{tpu_custom_call.1} parent=1 // pred_check_branch
      %11 = sbr.rel (0) target = $region5
    $region4: #{tpu_custom_call.1} parent=1 // pred_region
      %s12 = sadd.s32 0, 0
      %14 = vsyncadd [#allocation3], 0
      %s15 = smul.addr %s12, 8
      %s16 = scalar_lea.hbm %s0, %s15
      %s18 = sshll.u32 %s16, 4
      %s19 = int_to_ptr.hbm [resolvable:$true] %s18
      %s20 = sshll.u32 [#allocation2], 4
      %s21 = int_to_ptr.vmem [resolvable:$true] %s20
      %23 = dma.hbm_to_vmem [thread:$0]  %s19, 128, %s21, [#allocation3]
    $region5: #{tpu_custom_call.1} parent=1 // pred_fallthru
      _
    // Predicated region
    $region6: #{tpu_custom_call.1} parent=1 // pred_check
      _
    $region7: #{tpu_custom_call.1} parent=1 // pred_check_branch
      %25 = sbr.rel (0) target = $region9
    $region8: #{tpu_custom_call.1} parent=1 // pred_region
      %s26 = sadd.s32 0, 0
      %28 = vsyncadd [#allocation6], 0
      %s29 = smul.addr %s26, 8
      %s30 = scalar_lea.hbm %s1, %s29
      %s32 = sshll.u32 %s30, 4
      %s33 = int_to_ptr.hbm [resolvable:$true] %s32
      %s34 = sshll.u32 [#allocation5], 4
      %s35 = int_to_ptr.vmem [resolvable:$true] %s34
      %37 = dma.hbm_to_vmem [thread:$0]  %s33, 128, %s35, [#allocation6]
    $region9: #{tpu_custom_call.1} parent=1 // pred_fallthru
      _
    // Predicated region
    $region10: #{tpu_custom_call.1} parent=1 // pred_check
      _
    $region11: #{tpu_custom_call.1} parent=1 // pred_check_branch
      %39 = sbr.rel (0) target = $region13
    $region12: #{tpu_custom_call.1} parent=1 // pred_region
      %41 = dma.done [#allocation3], 128
    $region13: #{tpu_custom_call.1} parent=1 // pred_fallthru
      _
    // Predicated region
    $region14: #{tpu_custom_call.1} parent=1 // pred_check
      _
    $region15: #{tpu_custom_call.1} parent=1 // pred_check_branch
      %43 = sbr.rel (0) target = $region17
    $region16: #{tpu_custom_call.1} parent=1 // pred_region
      %45 = dma.done [#allocation6], 128
    $region17: #{tpu_custom_call.1} parent=1 // pred_fallthru
      _
    %s46 = sadd.s32 0, 0
    %s47 = sadd.s32 0, 0
    %p48 = scmp.eq.s32.totalorder 0, 0
    // Predicated region
    $region18: #{tpu_custom_call.1} parent=1 // pred_check
      %p49 = pneg %p48
    $region19: #{tpu_custom_call.1} parent=1 // pred_check_branch
      %51 = sbr.rel (%p49) target = $region21
    $region20: #{tpu_custom_call.1} parent=1 // pred_region
      %vm52 = vcmask 261120
      %53 = vst.msk [vmem:[#allocation7] sm:$0xff] %vm52, 0.0
    $region21: #{tpu_custom_call.1} parent=1 // pred_fallthru
      _
    %v54 = vld [vmem:[#allocation2] sm:$0xff]
    %v55 = vld [vmem:[#allocation5] sm:$0xff]
    %v56 = vmul.f32 %v54, %v55
    %v57 = vmax.f32 %v54, 0.0
    %v58 = vsub.f32 %v56, %v57
    %v59 = vand.u32 2147483647, %v54
    %v60 = vsub.f32 0.0, %v59
    %v61 = vmul.f32 %v60, 1.442695
    %v62 = vpow.pop %v61
    %v63 = vadd.f32 %v62, 1.0
    %v64 = vlog2.pop %v63
    %v65 = vmul.f32 %v64, 0.6931472
    %v66 = vmul.f32 -0.5, %v62
    %v67 = vadd.f32 %v66, 1.0
    %v68 = vmul.f32 %v67, %v62
    %v69 = vand.u32 2147483647, %v62
    %vm70 = vcmp.lt.f32.partialorder %v69, 0.0004427343
    %v71 = vsel %vm70, %v68, %v65
    %v72 = vsub.f32 %v58, %v71
    %v73 = vld [vmem:[#allocation7] sm:$0xff]
    %v74 = vadd.f32 %v72, 0.0
    %v75 = vadd.f32 %v73, %v74
    %vm76 = vcmask 261120
    %77 = vst.msk [vmem:[#allocation7] sm:$0xff] %vm76, %v75
    // Predicated region
    $region22: #{tpu_custom_call.1} parent=1 // pred_check
      _
    $region23: #{tpu_custom_call.1} parent=1 // pred_check_branch
      %79 = sbr.rel (0) target = $region25
    $region24: #{tpu_custom_call.1} parent=1 // pred_region
      %81 = vsyncadd [#allocation4], 0
      %s83 = sshll.u32 [#allocation7], 4
      %s84 = int_to_ptr.vmem [resolvable:$true] %s83
      %s85 = sshll.u32 %s2, 4
      %s86 = int_to_ptr.hbm [resolvable:$true] %s85
      %88 = dma.vmem_to_hbm [thread:$0]  %s84, 128, %s86, [#allocation4]
    $region25: #{tpu_custom_call.1} parent=1 // pred_fallthru
      _
    // Predicated region
    $region26: #{tpu_custom_call.1} parent=1 // pred_check
      _
    $region27: #{tpu_custom_call.1} parent=1 // pred_check_branch
      %90 = sbr.rel (0) target = $region29
    $region28: #{tpu_custom_call.1} parent=1 // pred_region
      %92 = dma.done [#allocation4], 128
    $region29: #{tpu_custom_call.1} parent=1 // pred_fallthru
      _
    %93 = vsyncpa [#allocation3], 1
    %94 = vsyncpa [#allocation6], 1
    %95 = vsyncpa [#allocation4], 1

</llo_original>
